<compile_context>
chip_gen: v7x
topology: tpu7x:2x2x1
jax: 0.10.0
libtpu: 0.0.40
codegen_flags: <defaults>
</compile_context>

<pallas_src>
import jax
import jax.numpy as jnp
from jax.experimental import pallas as pl
from jax.experimental.pallas import tpu as pltpu

EPS = 1e-5


def _round_up(x, m):
    return ((x + m - 1) // m) * m


def _plan_tiles(P, N, target=2048):
    """Pick (tile_p, p_pad, n_splits) for the spatial (OH*OW) axis."""
    tile_p = None
    for t in range(min(target, P), 7, -1):      # largest exact divisor, %8 == 0
        if P % t == 0 and t % 8 == 0:
            tile_p = t
            break
    if tile_p is None:                          # ragged fallback: pad + fixup
        tile_p = min(_round_up(min(target, P), 8), _round_up(P, 8))
        p_pad = _round_up(P, tile_p)
    else:
        p_pad = P
    num_tiles = p_pad // tile_p
    # v7x: make sure both TensorCores get parallel grid work when N is odd/1.
    n_splits = 2 if (N % 2 == 1 and num_tiles % 2 == 0) else 1
    return tile_p, p_pad, n_splits


# ---------------------------------------------------------------------------
# Fused kernel: conv1 (im2col matmul) + folded BN affine + relu + pool-sum
# ---------------------------------------------------------------------------
def _conv_pool_kernel(p_ref, w_ref, scale_ref, shift_ref, o_ref, acc_ref):
    s = pl.program_id(1)

    @pl.when(s == 0)
    def _():
        acc_ref[...] = jnp.zeros_like(acc_ref)

    # conv1 as im2col matmul on the MXU (bf16 inputs, f32 accumulation),
    # fused with the folded (data_bn + bn1) affine and relu.  Epilogue math
    # stays f32 (v5e has no bf16 VPU/EUP path).
    conv = jnp.dot(p_ref[0], w_ref[...], preferred_element_type=jnp.float32)
    y = jnp.maximum(conv * scale_ref[...] + shift_ref[...], 0.0)

    # running sum for the global average pool (scaled by 1/P outside)
    acc_ref[...] += jnp.sum(y, axis=0, keepdims=True)

    @pl.when(s == pl.num_programs(1) - 1)
    def _():
        o_ref[0] = acc_ref[...]


def fused_conv_pool(patches, w_fold, scale1, shift_total, *, tile_p):
    """patches: (M, p_len, K) bf16 (M = samples * spatial_splits);
    w_fold: (K, Cout) bf16; scale1/shift_total: (1, Cout) f32.
    Returns (M, 1, Cout) f32 pooled partial sums (un-normalized)."""
    M, p_len, K = patches.shape
    Cout = w_fold.shape[1]
    assert p_len % tile_p == 0
    num_tiles = p_len // tile_p
    out = pl.pallas_call(
        _conv_pool_kernel,
        out_shape=jax.ShapeDtypeStruct((M, 1, Cout), jnp.float32),
        grid_spec=pltpu.PrefetchScalarGridSpec(
            num_scalar_prefetch=0,
            grid=(M, num_tiles),
            in_specs=[
                pl.BlockSpec((1, tile_p, K), lambda n, s: (n, s, 0)),
                # broadcast operands: constant index maps -> stay VMEM-resident
                pl.BlockSpec((K, Cout), lambda n, s: (0, 0)),
                pl.BlockSpec((1, Cout), lambda n, s: (0, 0)),
                pl.BlockSpec((1, Cout), lambda n, s: (0, 0)),
            ],
            out_specs=pl.BlockSpec((1, 1, Cout), lambda n, s: (n, 0, 0)),
            scratch_shapes=[pltpu.VMEM((1, Cout), jnp.float32)],
        ),
        compiler_params=pltpu.CompilerParams(
            dimension_semantics=("parallel", "arbitrary"),
        ),
    )(patches, w_fold, scale1, shift_total)
    return out


# ---------------------------------------------------------------------------
# Glue: NHWC im2col for a 7x7 stride-2 pad-3 conv, (ki, kj, c) column order
# ---------------------------------------------------------------------------
def im2col_7x7_s2_p3_nhwc(x_nchw, pad_val):
    """pad_val (per channel) is chosen so the folded data_bn affine maps the
    padded ring to exactly zero (the reference zero-pads AFTER data_bn).
    Returns (N, OH*OW, 49*C) bf16 patches with (ki, kj, c) column ordering
    (concat along the LAST axis -> no big transpose of the expanded tensor)."""
    N, C, H, W = x_nchw.shape
    OH = (H + 2 * 3 - 7) // 2 + 1
    OW = (W + 2 * 3 - 7) // 2 + 1
    x_nhwc = jnp.transpose(x_nchw, (0, 2, 3, 1))            # raw input, small
    pv = pad_val[None, None, None, :]
    # pad-ring arithmetic in f32, cast the small padded input to bf16 once
    xp = jnp.pad(x_nhwc - pv, ((0, 0), (3, 3), (3, 3), (0, 0))) + pv
    xp = xp.astype(jnp.bfloat16)
    cols = []
    for i in range(7):
        for j in range(7):
            cols.append(xp[:, i: i + 2 * OH: 2, j: j + 2 * OW: 2, :])
    p = jnp.concatenate(cols, axis=-1)                       # (N, OH, OW, 49*C)
    return p.reshape(N, OH * OW, 49 * C), OH, OW


def bn_fold(gamma, beta, mean, var):
    scale = gamma / jnp.sqrt(var + EPS)
    shift = beta - mean * scale
    return scale, shift


# ---------------------------------------------------------------------------
# Model
# ---------------------------------------------------------------------------
class PallasTSNModel:
    def __init__(self, num_class, num_segments, representation="mv", seed=0,
                 tile_target=2048):
        assert representation == "mv", "this synthetic build uses the mv path"
        self._representation = representation
        self.num_segments = num_segments
        self.num_class = num_class
        self._input_size = 224           # crop_size property equivalent
        self.tile_target = tile_target

        in_ch = 2    # mv representation -> 2-channel conv1
        feat = 64    # post-conv1 feature dim (see TODO above)
        self.in_ch, self.feat = in_ch, feat

        k = jax.random.split(jax.random.PRNGKey(seed), 10)
        f32 = jnp.float32
        # data_bn (BatchNorm2d(2)) parameters + running stats
        self.bn_d_gamma = jax.random.normal(k[0], (in_ch,), f32) * 0.1 + 1.0
        self.bn_d_beta = jax.random.normal(k[1], (in_ch,), f32) * 0.1
        self.bn_d_mean = jax.random.normal(k[2], (in_ch,), f32) * 0.1
        self.bn_d_var = jnp.abs(jax.random.normal(k[3], (in_ch,), f32)) * 0.1 + 0.9
        # conv1: (64, 2, 7, 7), no bias
        self.w_conv = jax.random.normal(k[4], (feat, in_ch, 7, 7), f32) * 0.05
        # bn1 (BatchNorm2d(64))
        self.bn1_gamma = jax.random.normal(k[5], (feat,), f32) * 0.1 + 1.0
        self.bn1_beta = jax.random.normal(k[6], (feat,), f32) * 0.1
        self.bn1_mean = jax.random.normal(k[7], (feat,), f32) * 0.1
        self.bn1_var = jnp.abs(jax.random.normal(k[8], (feat,), f32)) * 0.1 + 0.9
        # fc head
        self.w_fc = jax.random.normal(k[9], (feat, num_class), f32) * 0.05
        self.b_fc = jnp.zeros((1, num_class), f32)

    def __call__(self, x):
        # x: (B, T, C, H, W)  ->  view(-1, C, H, W)
        C, H, W = x.shape[-3:]
        x = x.reshape((-1, C, H, W)).astype(jnp.float32)
        N = x.shape[0]

        # ---- fold data_bn into conv1 ------------------------------------
        scale_d, shift_d = bn_fold(self.bn_d_gamma, self.bn_d_beta,
                                   self.bn_d_mean, self.bn_d_var)
        # pad raw input with -shift/scale so the folded affine (scale into
        # weights, shift into bias) maps the padded ring to exactly zero.
        pad_val = -shift_d / scale_d
        patches, OH, OW = im2col_7x7_s2_p3_nhwc(x, pad_val)   # (N, P, K) bf16
        P = OH * OW
        K = 49 * C

        # fold data_bn scale into the conv weight, shift into a bias term.
        # Weight reordered to the (ki, kj, c) patch-column order.
        w_mat = self.w_conv.transpose(2, 3, 1, 0).reshape(K, self.feat)
        scale_col = jnp.tile(scale_d, 49)[:, None]            # (K, 1)
        shift_col = jnp.tile(shift_d, 49)                     # (K,)
        w_fold = (w_mat * scale_col).astype(jnp.bfloat16)
        bias_conv = shift_col @ w_mat                         # (64,)

        # bn1 folded on top; epilogue math stays f32 (v5e-friendly)
        scale1, shift1 = bn_fold(self.bn1_gamma, self.bn1_beta,
                                 self.bn1_mean, self.bn1_var)
        shift_total = (shift1 + bias_conv * scale1)[None, :]  # (1, 64)
        scale1 = scale1[None, :]

        # ---- spatial tiling / v7x split ----------------------------------
        tile_p, p_pad, n_splits = _plan_tiles(P, N, self.tile_target)
        if p_pad != P:
            patches = jnp.pad(patches, ((0, 0), (0, p_pad - P), (0, 0)))
        # free reshape: each spatial split becomes its own "sample" in the grid
        patches = patches.reshape(N * n_splits, p_pad // n_splits, K)

        partial = fused_conv_pool(patches, w_fold, scale1, shift_total,
                                  tile_p=tile_p)              # (N*s, 1, 64)
        pooled_sum = partial.reshape(N, n_splits, self.feat).sum(axis=1)

        # ragged-tail correction: each all-zero padded patch row contributed
        # exactly relu(shift_total) to the pool sum (no per-tile mask needed).
        n_pad = p_pad - P
        if n_pad:
            pooled_sum = pooled_sum - n_pad * jnp.maximum(shift_total, 0.0)

        pooled = pooled_sum * (1.0 / P)                       # (N, 64)
        # tiny fc head outside the kernel (one (N,64)x(64,nc) matmul)
        return jnp.dot(pooled, self.w_fc,
                       precision=jax.lax.Precision.HIGHEST) + self.b_fc


# ---------------------------------------------------------------------------
# Pure-JAX f32 reference of the same simplified forward (for sanity checking)
# ---------------------------------------------------------------------------
def reference_forward(model, x):
    C, H, W = x.shape[-3:]
    x = x.reshape((-1, C, H, W)).astype(jnp.float32)
    scale_d, shift_d = bn_fold(model.bn_d_gamma, model.bn_d_beta,
                               model.bn_d_mean, model.bn_d_var)
    x = x * scale_d[None, :, None, None] + shift_d[None, :, None, None]
    y = jax.lax.conv_general_dilated(
        x, model.w_conv, window_strides=(2, 2), padding=((3, 3), (3, 3)),
        dimension_numbers=("NCHW", "OIHW", "NCHW"),
        precision=jax.lax.Precision.HIGHEST)
    scale1, shift1 = bn_fold(model.bn1_gamma, model.bn1_beta,
                             model.bn1_mean, model.bn1_var)
    y = y * scale1[None, :, None, None] + shift1[None, :, None, None]
    y = jnp.maximum(y, 0.0)
    pooled = jnp.mean(y, axis=(2, 3))
    return jnp.dot(pooled, model.w_fc,
                   precision=jax.lax.Precision.HIGHEST) + model.b_fc


# ---------------------------------------------------------------------------
if __name__ == "__main__":
    num_class = 10
    num_segments = 2
    batch = 2
    C, H, W = 2, 16, 16  # mv representation -> 2 channels

    model = PallasTSNModel(num_class, num_segments, representation="mv", seed=0)
    fwd = jax.jit(model.__call__)

    x = jax.random.normal(
        jax.random.PRNGKey(0), (batch, num_segments, C, H, W), jnp.float32
    )
    out = jax.block_until_ready(fwd(x))
    assert out.shape == (batch * num_segments, num_class), out.shape
    assert bool(jnp.all(jnp.isfinite(out)))
    ref = reference_forward(model, x)
    err = float(jnp.max(jnp.abs(out - ref)))
    assert err < 5e-2, f"max abs err {err}"

    # extra shape checks: (a) multi-tile reduction + 2-way spatial split
    # (v7x path), (b) ragged-tail epilogue correction.
    for shape in [(1, 1, C, 160, 160), (1, 1, C, 14, 14)]:
        xs = jax.random.normal(jax.random.PRNGKey(1), shape, jnp.float32)
        o = jax.block_until_ready(jax.jit(model.__call__)(xs))
        r = reference_forward(model, xs)
        e = float(jnp.max(jnp.abs(o - r)))
        assert o.shape == (shape[0] * shape[1], num_class), o.shape
        assert e < 5e-2, f"shape {shape}: max abs err {e}"

    print("KERNEL_OK")
</pallas_src>

<mosaic_0001>
module attributes {stable_mosaic.version = 11 : i64} {
  func.func @_conv_pool_kernel(%arg0: i32, %arg1: i32, %arg2: memref<1x64x98xbf16, #tpu.memory_space<vmem>>, %arg3: memref<98x64xbf16, #tpu.memory_space<vmem>>, %arg4: memref<1x64xf32, #tpu.memory_space<vmem>>, %arg5: memref<1x64xf32, #tpu.memory_space<vmem>>, %arg6: memref<1x1x64xf32, #tpu.memory_space<vmem>>, %arg7: memref<1x64xf32, #tpu.memory_space<vmem>>) attributes {dimension_semantics = [#tpu.dimension_semantics<parallel>, #tpu.dimension_semantics<arbitrary>], iteration_bounds = array<i64: 4, 1>, scalar_prefetch = 0 : i64, scratch_operands = 1 : i64, tpu.core_type = #tpu.core_type<tc>, window_params = [{transform_indices = @transform_0, window_bounds = array<i64: 1, 64, 98>}, {pipeline_mode = #tpu.pipeline_mode<synchronous>, transform_indices = @transform_1, window_bounds = array<i64: 98, 64>}, {pipeline_mode = #tpu.pipeline_mode<synchronous>, transform_indices = @transform_2, window_bounds = array<i64: 1, 64>}, {pipeline_mode = #tpu.pipeline_mode<synchronous>, transform_indices = @transform_3, window_bounds = array<i64: 1, 64>}, {transform_indices = @transform_4, window_bounds = array<i64: 1, 1, 64>}]} {
    %c0_i32 = arith.constant 0 : i32
    %0 = arith.cmpi eq, %arg1, %c0_i32 : i32
    %1 = arith.extui %0 : i1 to i32
    %c0_i32_0 = arith.constant 0 : i32
    %2 = arith.cmpi ne, %1, %c0_i32_0 : i32
    scf.if %2 {
      %cst_17 = arith.constant 0.000000e+00 : f32
      %23 = vector.broadcast %cst_17 : f32 to vector<1x64xf32>
      %c0_18 = arith.constant 0 : index
      %c0_19 = arith.constant 0 : index
      %24 = vector.load %arg7[%c0_18, %c0_19] : memref<1x64xf32, #tpu.memory_space<vmem>>, vector<1x64xf32>
      tpu.vector_store %arg7[%c0_18, %c0_19], %23 {strides = array<i32>} : memref<1x64xf32, #tpu.memory_space<vmem>>, vector<1x64xf32>,
    } else {
    }
    %c0 = arith.constant 0 : index
    %c0_1 = arith.constant 0 : index
    %c0_2 = arith.constant 0 : index
    %3 = vector.load %arg2[%c0, %c0_1, %c0_2] : memref<1x64x98xbf16, #tpu.memory_space<vmem>>, vector<1x64x98xbf16>
    %4 = vector.shape_cast %3 : vector<1x64x98xbf16> to vector<64x98xbf16>
    %c0_3 = arith.constant 0 : index
    %c0_4 = arith.constant 0 : index
    %5 = vector.load %arg3[%c0_3, %c0_4] : memref<98x64xbf16, #tpu.memory_space<vmem>>, vector<98x64xbf16>
    %cst = arith.constant dense<0.000000e+00> : vector<64x64xf32>
    %6 = tpu.matmul %4, %5, %cst {dimension_numbers = #tpu.dot_dimension_numbers<[1], [0], [0], [1], [0, 0, 1, 1], [], []>} : vector<64x98xbf16>, vector<98x64xbf16>, vector<64x64xf32> -> vector<64x64xf32>
    %c0_5 = arith.constant 0 : index
    %c0_6 = arith.constant 0 : index
    %7 = vector.load %arg4[%c0_5, %c0_6] : memref<1x64xf32, #tpu.memory_space<vmem>>, vector<1x64xf32>
    %8 = vector.broadcast %7 : vector<1x64xf32> to vector<64x64xf32>
    %9 = arith.mulf %6, %8 : vector<64x64xf32>
    %c0_7 = arith.constant 0 : index
    %c0_8 = arith.constant 0 : index
    %10 = vector.load %arg5[%c0_7, %c0_8] : memref<1x64xf32, #tpu.memory_space<vmem>>, vector<1x64xf32>
    %11 = vector.broadcast %10 : vector<1x64xf32> to vector<64x64xf32>
    %12 = arith.addf %9, %11 : vector<64x64xf32>
    %cst_9 = arith.constant 0.000000e+00 : f32
    %13 = vector.broadcast %cst_9 : f32 to vector<64x64xf32>
    %14 = arith.maximumf %12, %13 : vector<64x64xf32>
    %c0_10 = arith.constant 0 : index
    %c0_11 = arith.constant 0 : index
    %15 = vector.load %arg7[%c0_10, %c0_11] : memref<1x64xf32, #tpu.memory_space<vmem>>, vector<1x64xf32>
    %cst_12 = arith.constant dense<0.000000e+00> : vector<64xf32>
    %16 = vector.multi_reduction <add>, %14, %cst_12 [0] : vector<64x64xf32> to vector<64xf32>
    %17 = vector.shape_cast %16 : vector<64xf32> to vector<1x64xf32>
    %18 = arith.addf %15, %17 : vector<1x64xf32>
    %c0_13 = arith.constant 0 : index
    %c0_14 = arith.constant 0 : index
    %19 = vector.load %arg7[%c0_13, %c0_14] : memref<1x64xf32, #tpu.memory_space<vmem>>, vector<1x64xf32>
    tpu.vector_store %arg7[%c0_13, %c0_14], %18 {strides = array<i32>} : memref<1x64xf32, #tpu.memory_space<vmem>>, vector<1x64xf32>,
    %c0_i32_15 = arith.constant 0 : i32
    %20 = arith.cmpi eq, %arg1, %c0_i32_15 : i32
    %21 = arith.extui %20 : i1 to i32
    %c0_i32_16 = arith.constant 0 : i32
    %22 = arith.cmpi ne, %21, %c0_i32_16 : i32
    scf.if %22 {
      %c0_17 = arith.constant 0 : index
      %c0_18 = arith.constant 0 : index
      %23 = vector.load %arg7[%c0_17, %c0_18] : memref<1x64xf32, #tpu.memory_space<vmem>>, vector<1x64xf32>
      %c0_19 = arith.constant 0 : index
      %c0_20 = arith.constant 0 : index
      %c0_21 = arith.constant 0 : index
      %24 = vector.load %arg6[%c0_19, %c0_20, %c0_21] : memref<1x1x64xf32, #tpu.memory_space<vmem>>, vector<1x1x64xf32>
      %25 = vector.shape_cast %24 : vector<1x1x64xf32> to vector<1x64xf32>
      %26 = vector.shape_cast %23 : vector<1x64xf32> to vector<1x1x64xf32>
      tpu.vector_store %arg6[%c0_19, %c0_20, %c0_21], %26 {strides = array<i32>} : memref<1x1x64xf32, #tpu.memory_space<vmem>>, vector<1x1x64xf32>,
    } else {
    }
    return
  }
  func.func @transform_0(%arg0: i32, %arg1: i32) -> (i32, i32, i32) {
    %c0_i32 = arith.constant 0 : i32
    %c0_i32_0 = arith.constant 0 : i32
    return %arg0, %arg1, %c0_i32 : i32, i32, i32
  }
  func.func @transform_1(%arg0: i32, %arg1: i32) -> (i32, i32) {
    %c0_i32 = arith.constant 0 : i32
    %c0_i32_0 = arith.constant 0 : i32
    %c0_i32_1 = arith.constant 0 : i32
    return %c0_i32, %c0_i32_0 : i32, i32
  }
  func.func @transform_2(%arg0: i32, %arg1: i32) -> (i32, i32) {
    %c0_i32 = arith.constant 0 : i32
    %c0_i32_0 = arith.constant 0 : i32
    %c0_i32_1 = arith.constant 0 : i32
    return %c0_i32, %c0_i32_0 : i32, i32
  }
  func.func @transform_3(%arg0: i32, %arg1: i32) -> (i32, i32) {
    %c0_i32 = arith.constant 0 : i32
    %c0_i32_0 = arith.constant 0 : i32
    %c0_i32_1 = arith.constant 0 : i32
    return %c0_i32, %c0_i32_0 : i32, i32
  }
  func.func @transform_4(%arg0: i32, %arg1: i32) -> (i32, i32, i32) {
    %c0_i32 = arith.constant 0 : i32
    %c0_i32_0 = arith.constant 0 : i32
    %c0_i32_1 = arith.constant 0 : i32
    return %arg0, %c0_i32, %c0_i32_0 : i32, i32, i32
  }
}

</mosaic_0001>

<llo_original>
// kernel: tile.10
$region0: #{tile.10}
  #allocation0 [shape = 's32[1]{0}', space=sflag, size = 0x4, scoped, tag = 'scoped memory for tile.10']
  %s0 = inlined_call_operand.vmem [shape: f32[2], index: 0, kind: input, shape index: {}]
  %s1 = inlined_call_operand.vmem [shape: f32[49,2], index: 1, kind: output, shape index: {}]
  // Predicated region
  $region2: #{tile.10} parent=0 // pred_check
    _
  $region3: #{tile.10} parent=0 // pred_check_branch
    %3 = sbr.rel (0) target = $region5
  $region4: #{tile.10} parent=0 // pred_region
    _
  $region5: #{tile.10} parent=0 // pred_fallthru
    _
  %v4 = vld [vmem:[%s0] ss:$0 sm:$0xff]
  %5 = vst [vmem:[%s1] sm:$0xff] %v4
  %s6 = scalar_lea.vmem %s1, 8
  %7 = vst [vmem:[%s6] sm:$0xff] %v4
  %s8 = scalar_lea.vmem %s1, 16
  %9 = vst [vmem:[%s8] sm:$0xff] %v4
  %s10 = scalar_lea.vmem %s1, 24
  %11 = vst [vmem:[%s10] sm:$0xff] %v4
  %s12 = scalar_lea.vmem %s1, 32
  %13 = vst [vmem:[%s12] sm:$0xff] %v4
  %s14 = scalar_lea.vmem %s1, 40
  %15 = vst [vmem:[%s14] sm:$0xff] %v4
  %s16 = scalar_lea.vmem %s1, 48
  %17 = vst [vmem:[%s16] sm:$0xff] %v4

// kernel: mul.8
$region0: #{mul.8}
  %s0 = inlined_call_operand.vmem [shape: f32[49,2], index: 0, kind: input, shape index: {}]
  %s1 = inlined_call_operand.vmem [shape: f32[98], index: 1, kind: output, shape index: {}]
  $region1: #{mul.8} parent=0
    #allocation0 [shape = 'u8[4096]{0}', space=vmem, size = 0x1000, scoped, tag = 'scoped mem for output reshape']
    %v2 = vld [vmem:[%s0] sm:$0x1]
    %vm3 = vcmask 15360
    %4 = vst.msk [vmem:[#allocation0] sm:$0x1] %vm3, %v2
    %s5 = scalar_lea.vmem %s0, 48
    %v6 = vld [vmem:[%s5] sm:$0x1]
    %7 = vrot.lane.b32.xlu0 %v6, 96
    %v8 = vpop.permute.xlu0 %7
    %vm9 = vcmask 802560
    %10 = vst.msk [vmem:[#allocation0] sm:$0x1] %vm9, %v8
    %s11 = scalar_lea.vmem %s0, 47
    %v12 = vld [vmem:[%s11] sm:$0x1]
    %13 = vrot.lane.b32.xlu0 %v12, 94
    %v14 = vpop.permute.xlu0 %13
    %vm15 = vcmask 786160
    %16 = vst.msk [vmem:[#allocation0] sm:$0x1] %vm15, %v14
    %s17 = scalar_lea.vmem %s0, 46
    %v18 = vld [vmem:[%s17] sm:$0x1]
    %19 = vrot.lane.b32.xlu0 %v18, 92
    %v20 = vpop.permute.xlu0 %19
    %vm21 = vcmask 769760
    %22 = vst.msk [vmem:[#allocation0] sm:$0x1] %vm21, %v20
    %s23 = scalar_lea.vmem %s0, 45
    %v24 = vld [vmem:[%s23] sm:$0x1]
    %25 = vrot.lane.b32.xlu0 %v24, 90
    %v26 = vpop.permute.xlu0 %25
    %vm27 = vcmask 753360
    %28 = vst.msk [vmem:[#allocation0] sm:$0x1] %vm27, %v26
    %s29 = scalar_lea.vmem %s0, 44
    %v30 = vld [vmem:[%s29] sm:$0x1]
    %31 = vrot.lane.b32.xlu0 %v30, 88
    %v32 = vpop.permute.xlu0 %31
    %vm33 = vcmask 736960
    %34 = vst.msk [vmem:[#allocation0] sm:$0x1] %vm33, %v32
    %s35 = scalar_lea.vmem %s0, 43
    %v36 = vld [vmem:[%s35] sm:$0x1]
    %37 = vrot.lane.b32.xlu0 %v36, 86
    %v38 = vpop.permute.xlu0 %37
    %vm39 = vcmask 720560
    %40 = vst.msk [vmem:[#allocation0] sm:$0x1] %vm39, %v38
    %s41 = scalar_lea.vmem %s0, 42
    %v42 = vld [vmem:[%s41] sm:$0x1]
    %43 = vrot.lane.b32.xlu0 %v42, 84
    %v44 = vpop.permute.xlu0 %43
    %vm45 = vcmask 704160
    %46 = vst.msk [vmem:[#allocation0] sm:$0x1] %vm45, %v44
    %s47 = scalar_lea.vmem %s0, 41
    %v48 = vld [vmem:[%s47] sm:$0x1]
    %49 = vrot.lane.b32.xlu0 %v48, 82
    %v50 = vpop.permute.xlu0 %49
    %vm51 = vcmask 687760
    %52 = vst.msk [vmem:[#allocation0] sm:$0x1] %vm51, %v50
    %s53 = scalar_lea.vmem %s0, 40
    %v54 = vld [vmem:[%s53] sm:$0x1]
    %55 = vrot.lane.b32.xlu0 %v54, 80
    %v56 = vpop.permute.xlu0 %55
    %vm57 = vcmask 671360
    %58 = vst.msk [vmem:[#allocation0] sm:$0x1] %vm57, %v56
    %s59 = scalar_lea.vmem %s0, 39
    %v60 = vld [vmem:[%s59] sm:$0x1]
    %61 = vrot.lane.b32.xlu0 %v60, 78
    %v62 = vpop.permute.xlu0 %61
    %vm63 = vcmask 654960
    %64 = vst.msk [vmem:[#allocation0] sm:$0x1] %vm63, %v62
    %s65 = scalar_lea.vmem %s0, 38
    %v66 = vld [vmem:[%s65] sm:$0x1]
    %67 = vrot.lane.b32.xlu0 %v66, 76
    %v68 = vpop.permute.xlu0 %67
    %vm69 = vcmask 638560
    %70 = vst.msk [vmem:[#allocation0] sm:$0x1] %vm69, %v68
    %s71 = scalar_lea.vmem %s0, 37
    %v72 = vld [vmem:[%s71] sm:$0x1]
    %73 = vrot.lane.b32.xlu0 %v72, 74
    %v74 = vpop.permute.xlu0 %73
    %vm75 = vcmask 622160
    %76 = vst.msk [vmem:[#allocation0] sm:$0x1] %vm75, %v74
    %s77 = scalar_lea.vmem %s0, 36
    %v78 = vld [vmem:[%s77] sm:$0x1]
    %79 = vrot.lane.b32.xlu0 %v78, 72
    %v80 = vpop.permute.xlu0 %79
    %vm81 = vcmask 605760
    %82 = vst.msk [vmem:[#allocation0] sm:$0x1] %vm81, %v80
    %s83 = scalar_lea.vmem %s0, 35
    %v84 = vld [vmem:[%s83] sm:$0x1]
    %85 = vrot.lane.b32.xlu0 %v84, 70
    %v86 = vpop.permute.xlu0 %85
    %vm87 = vcmask 589360
    %88 = vst.msk [vmem:[#allocation0] sm:$0x1] %vm87, %v86
    %s89 = scalar_lea.vmem %s0, 34
    %v90 = vld [vmem:[%s89] sm:$0x1]
    %91 = vrot.lane.b32.xlu0 %v90, 68
    %v92 = vpop.permute.xlu0 %91
    %vm93 = vcmask 572960
    %94 = vst.msk [vmem:[#allocation0] sm:$0x1] %vm93, %v92
    %s95 = scalar_lea.vmem %s0, 33
    %v96 = vld [vmem:[%s95] sm:$0x1]
    %97 = vrot.lane.b32.xlu0 %v96, 66
    %v98 = vpop.permute.xlu0 %97
    %vm99 = vcmask 556560
    %100 = vst.msk [vmem:[#allocation0] sm:$0x1] %vm99, %v98
    %s101 = scalar_lea.vmem %s0, 32
    %v102 = vld [vmem:[%s101] sm:$0x1]
    %103 = vrot.lane.b32.xlu0 %v102, 64
    %v104 = vpop.permute.xlu0 %103
    %vm105 = vcmask 540160
    %106 = vst.msk [vmem:[#allocation0] sm:$0x1] %vm105, %v104
    %s107 = scalar_lea.vmem %s0, 31
    %v108 = vld [vmem:[%s107] sm:$0x1]
    %109 = vrot.lane.b32.xlu0 %v108, 62
    %v110 = vpop.permute.xlu0 %109
    %vm111 = vcmask 523760
    %112 = vst.msk [vmem:[#allocation0] sm:$0x1] %vm111, %v110
    %s113 = scalar_lea.vmem %s0, 30
    %v114 = vld [vmem:[%s113] sm:$0x1]
    %115 = vrot.lane.b32.xlu0 %v114, 60
    %v116 = vpop.permute.xlu0 %115
    %vm117 = vcmask 507360
    %118 = vst.msk [vmem:[#allocation0] sm:$0x1] %vm117, %v116
    %s119 = scalar_lea.vmem %s0, 29
    %v120 = vld [vmem:[%s119] sm:$0x1]
    %121 = vrot.lane.b32.xlu0 %v120, 58
    %v122 = vpop.permute.xlu0 %121
    %vm123 = vcmask 490960
    %124 = vst.msk [vmem:[#allocation0] sm:$0x1] %vm123, %v122
    %s125 = scalar_lea.vmem %s0, 28
    %v126 = vld [vmem:[%s125] sm:$0x1]
    %127 = vrot.lane.b32.xlu0 %v126, 56
    %v128 = vpop.permute.xlu0 %127
    %vm129 = vcmask 474560
    %130 = vst.msk [vmem:[#allocation0] sm:$0x1] %vm129, %v128
    %s131 = scalar_lea.vmem %s0, 27
    %v132 = vld [vmem:[%s131] sm:$0x1]
    %133 = vrot.lane.b32.xlu0 %v132, 54
    %v134 = vpop.permute.xlu0 %133
    %vm135 = vcmask 458160
    %136 = vst.msk [vmem:[#allocation0] sm:$0x1] %vm135, %v134
    %s137 = scalar_lea.vmem %s0, 26
    %v138 = vld [vmem:[%s137] sm:$0x1]
    %139 = vrot.lane.b32.xlu0 %v138, 52
    %v140 = vpop.permute.xlu0 %139
    %vm141 = vcmask 441760
    %142 = vst.msk [vmem:[#allocation0] sm:$0x1] %vm141, %v140
    %s143 = scalar_lea.vmem %s0, 25
    %v144 = vld [vmem:[%s143] sm:$0x1]
    %145 = vrot.lane.b32.xlu0 %v144, 50
    %v146 = vpop.permute.xlu0 %145
    %vm147 = vcmask 425360
    %148 = vst.msk [vmem:[#allocation0] sm:$0x1] %vm147, %v146
    %s149 = scalar_lea.vmem %s0, 24
    %v150 = vld [vmem:[%s149] sm:$0x1]
    %151 = vrot.lane.b32.xlu0 %v150, 48
    %v152 = vpop.permute.xlu0 %151
    %vm153 = vcmask 408960
    %154 = vst.msk [vmem:[#allocation0] sm:$0x1] %vm153, %v152
    %s155 = scalar_lea.vmem %s0, 23
    %v156 = vld [vmem:[%s155] sm:$0x1]
    %157 = vrot.lane.b32.xlu0 %v156, 46
    %v158 = vpop.permute.xlu0 %157
    %vm159 = vcmask 392560
    %160 = vst.msk [vmem:[#allocation0] sm:$0x1] %vm159, %v158
    %s161 = scalar_lea.vmem %s0, 22
    %v162 = vld [vmem:[%s161] sm:$0x1]
    %163 = vrot.lane.b32.xlu0 %v162, 44
    %v164 = vpop.permute.xlu0 %163
    %vm165 = vcmask 376160
    %166 = vst.msk [vmem:[#allocation0] sm:$0x1] %vm165, %v164
    %s167 = scalar_lea.vmem %s0, 21
    %v168 = vld [vmem:[%s167] sm:$0x1]
    %169 = vrot.lane.b32.xlu0 %v168, 42
    %v170 = vpop.permute.xlu0 %169
    %vm171 = vcmask 359760
    %172 = vst.msk [vmem:[#allocation0] sm:$0x1] %vm171, %v170
    %s173 = scalar_lea.vmem %s0, 20
    %v174 = vld [vmem:[%s173] sm:$0x1]
    %175 = vrot.lane.b32.xlu0 %v174, 40
    %v176 = vpop.permute.xlu0 %175
    %vm177 = vcmask 343360
    %178 = vst.msk [vmem:[#allocation0] sm:$0x1] %vm177, %v176
    %s179 = scalar_lea.vmem %s0, 19
    %v180 = vld [vmem:[%s179] sm:$0x1]
    %181 = vrot.lane.b32.xlu0 %v180, 38
    %v182 = vpop.permute.xlu0 %181
    %vm183 = vcmask 326960
    %184 = vst.msk [vmem:[#allocation0] sm:$0x1] %vm183, %v182
    %s185 = scalar_lea.vmem %s0, 18
    %v186 = vld [vmem:[%s185] sm:$0x1]
    %187 = vrot.lane.b32.xlu0 %v186, 36
    %v188 = vpop.permute.xlu0 %187
    %vm189 = vcmask 310560
    %190 = vst.msk [vmem:[#allocation0] sm:$0x1] %vm189, %v188
    %s191 = scalar_lea.vmem %s0, 17
    %v192 = vld [vmem:[%s191] sm:$0x1]
    %193 = vrot.lane.b32.xlu0 %v192, 34
    %v194 = vpop.permute.xlu0 %193
    %vm195 = vcmask 294160
    %196 = vst.msk [vmem:[#allocation0] sm:$0x1] %vm195, %v194
    %s197 = scalar_lea.vmem %s0, 16
    %v198 = vld [vmem:[%s197] sm:$0x1]
    %199 = vrot.lane.b32.xlu0 %v198, 32
    %v200 = vpop.permute.xlu0 %199
    %vm201 = vcmask 277760
    %202 = vst.msk [vmem:[#allocation0] sm:$0x1] %vm201, %v200
    %s203 = scalar_lea.vmem %s0, 15
    %v204 = vld [vmem:[%s203] sm:$0x1]
    %205 = vrot.lane.b32.xlu0 %v204, 30
    %v206 = vpop.permute.xlu0 %205
    %vm207 = vcmask 261360
    %208 = vst.msk [vmem:[#allocation0] sm:$0x1] %vm207, %v206
    %s209 = scalar_lea.vmem %s0, 14
    %v210 = vld [vmem:[%s209] sm:$0x1]
    %211 = vrot.lane.b32.xlu0 %v210, 28
    %v212 = vpop.permute.xlu0 %211
    %vm213 = vcmask 244960
    %214 = vst.msk [vmem:[#allocation0] sm:$0x1] %vm213, %v212
    %s215 = scalar_lea.vmem %s0, 13
    %v216 = vld [vmem:[%s215] sm:$0x1]
    %217 = vrot.lane.b32.xlu0 %v216, 26
    %v218 = vpop.permute.xlu0 %217
    %vm219 = vcmask 228560
    %220 = vst.msk [vmem:[#allocation0] sm:$0x1] %vm219, %v218
    %s221 = scalar_lea.vmem %s0, 12
    %v222 = vld [vmem:[%s221] sm:$0x1]
    %223 = vrot.lane.b32.xlu0 %v222, 24
    %v224 = vpop.permute.xlu0 %223
    %vm225 = vcmask 212160
    %226 = vst.msk [vmem:[#allocation0] sm:$0x1] %vm225, %v224
    %s227 = scalar_lea.vmem %s0, 11
    %v228 = vld [vmem:[%s227] sm:$0x1]
    %229 = vrot.lane.b32.xlu0 %v228, 22
    %v230 = vpop.permute.xlu0 %229
    %vm231 = vcmask 195760
    %232 = vst.msk [vmem:[#allocation0] sm:$0x1] %vm231, %v230
    %s233 = scalar_lea.vmem %s0, 10
    %v234 = vld [vmem:[%s233] sm:$0x1]
    %235 = vrot.lane.b32.xlu0 %v234, 20
    %v236 = vpop.permute.xlu0 %235
    %vm237 = vcmask 179360
    %238 = vst.msk [vmem:[#allocation0] sm:$0x1] %vm237, %v236
    %s239 = scalar_lea.vmem %s0, 9
    %v240 = vld [vmem:[%s239] sm:$0x1]
    %241 = vrot.lane.b32.xlu0 %v240, 18
    %v242 = vpop.permute.xlu0 %241
    %vm243 = vcmask 162960
    %244 = vst.msk [vmem:[#allocation0] sm:$0x1] %vm243, %v242
    %s245 = scalar_lea.vmem %s0, 8
    %v246 = vld [vmem:[%s245] sm:$0x1]
    %247 = vrot.lane.b32.xlu0 %v246, 16
    %v248 = vpop.permute.xlu0 %247
    %vm249 = vcmask 146560
    %250 = vst.msk [vmem:[#allocation0] sm:$0x1] %vm249, %v248
    %s251 = scalar_lea.vmem %s0, 7
    %v252 = vld [vmem:[%s251] sm:$0x1]
    %253 = vrot.lane.b32.xlu0 %v252, 14
    %v254 = vpop.permute.xlu0 %253
    %vm255 = vcmask 130160
    %256 = vst.msk [vmem:[#allocation0] sm:$0x1] %vm255, %v254
    %s257 = scalar_lea.vmem %s0, 6
    %v258 = vld [vmem:[%s257] sm:$0x1]
    %259 = vrot.lane.b32.xlu0 %v258, 12
    %v260 = vpop.permute.xlu0 %259
    %vm261 = vcmask 113760
    %262 = vst.msk [vmem:[#allocation0] sm:$0x1] %vm261, %v260
    %s263 = scalar_lea.vmem %s0, 5
    %v264 = vld [vmem:[%s263] sm:$0x1]
    %265 = vrot.lane.b32.xlu0 %v264, 10
    %v266 = vpop.permute.xlu0 %265
    %vm267 = vcmask 97360
    %268 = vst.msk [vmem:[#allocation0] sm:$0x1] %vm267, %v266
    %s269 = scalar_lea.vmem %s0, 4
    %v270 = vld [vmem:[%s269] sm:$0x1]
    %271 = vrot.lane.b32.xlu0 %v270, 8
    %v272 = vpop.permute.xlu0 %271
    %vm273 = vcmask 80960
    %274 = vst.msk [vmem:[#allocation0] sm:$0x1] %vm273, %v272
    %s275 = scalar_lea.vmem %s0, 3
    %v276 = vld [vmem:[%s275] sm:$0x1]
    %277 = vrot.lane.b32.xlu0 %v276, 6
    %v278 = vpop.permute.xlu0 %277
    %vm279 = vcmask 64560
    %280 = vst.msk [vmem:[#allocation0] sm:$0x1] %vm279, %v278
    %s281 = scalar_lea.vmem %s0, 2
    %v282 = vld [vmem:[%s281] sm:$0x1]
    %283 = vrot.lane.b32.xlu0 %v282, 4
    %v284 = vpop.permute.xlu0 %283
    %vm285 = vcmask 48160
    %286 = vst.msk [vmem:[#allocation0] sm:$0x1] %vm285, %v284
    %s287 = scalar_lea.vmem %s0, 1
    %v288 = vld [vmem:[%s287] sm:$0x1]
    %289 = vrot.lane.b32.xlu0 %v288, 2
    %v290 = vpop.permute.xlu0 %289
    %vm291 = vcmask 31760
    %292 = vst.msk [vmem:[#allocation0] sm:$0x1] %vm291, %v290
    %s294 = sshllo.u32 0, 1
    %v296 = vld [vmem:[#allocation0] sm:%s294]
    %s297 = sshllo.u32 0, 1
    %298 = vst [vmem:[%s1] sm:%s297] %v296

// kernel: a_call__.1
$region0: #{a_call__.1}
  #allocation0 [shape = 'u32[]', space=smem, size = 0x4, offset = 0x4, fixed_abs, tag = 'smem constant byte address 0x4 - core index']
  #allocation1 [shape = 'u32[144,128]{1,0:T(1,128)}', space=vmem, size = 0x12000, scoped, tag = 'internal scratch']
  #allocation2 [shape = 'f32[1,64]{1,0:T(1,128)}', space=vmem, size = 0x200, scoped, tag = 'scratch operand']
  %s0 = inlined_call_operand.vmem [shape: bf16[4,64,98], index: 0, kind: input, shape index: {}]
  %s1 = inlined_call_operand.vmem [shape: bf16[98,64], index: 1, kind: input, shape index: {}]
  %s2 = inlined_call_operand.vmem [shape: f32[1,64], index: 2, kind: input, shape index: {}]
  %s3 = inlined_call_operand.vmem [shape: f32[1,64], index: 3, kind: input, shape index: {}]
  %s4 = inlined_call_operand.vmem [shape: f32[4,1,64], index: 4, kind: output, shape index: {}]
  %s5 = sld [smem:[#allocation0]]
  $region57: #{a_call__.1} parent=0
    _
  %s7 = ssub.s32 1, %s5
  %s8 = scalar_select 0, %s7, %s5
  loop: start=0, step=1, limit=6
  $region2: #{a_call__.1} parent=0 // loop_pre_header
    _
  $region3: #{a_call__.1} parent=0 // loop_header
    %s10 = sphi 0, %s14
    %p11 = scmp.ge.s32.totalorder %s10, 6
    %s17 = sphi 0, %s29
    %s18 = sphi 0, %s25
    %s19 = sphi 0, %s17
    %s20 = sphi 0, %s18
    %s21 = sphi 0, %s19
    %s22 = sphi 0, %s20
    %s34 = sphi 0, %s36
    %s37 = sphi 0, %s34
    %s38 = sphi 0, %s37
    %s54 = sphi 0, %s38
    %s58 = sphi 0, %s58
    %s60 = sphi 0, %s58
    %s61 = sphi 0, %s60
    %s75 = sphi 0, %s61
    %s79 = sphi 0, %s79
    %s81 = sphi 0, %s79
    %s82 = sphi 0, %s81
    %s96 = sphi 0, %s82
    %s100 = sphi 0, %s100
    %s102 = sphi 0, %s100
    %s103 = sphi 0, %s102
    %s117 = sphi 0, %s103
    %s123 = sphi 0, %s125
    %s126 = sphi 0, %s123
    %s127 = sphi 0, %s126
    %s143 = sphi 0, %s127
  $region4: #{a_call__.1} parent=0 // loop_header_branch
    %13 = sbr.rel (%p11) target = $region8
  $region5: #{a_call__.1} parent=0 // loop_body
    %s15 = ssub.s32 %s10, 1
    %s16 = ssub.s32 %s10, 2
    %s23 = sadd.s32 1, %s18
    %p24 = scmp.ge.s32.totalorder %s23, 1
    %s25 = scalar_select %p24, 0, %s23
    %s26 = sadd.s32 1, %s17
    %s27 = scalar_select %p24, %s26, %s17
    %p28 = scmp.ge.s32.totalorder %s27, 4
    %s29 = scalar_select %p28, 0, %s27
    %s30 = ssub.s32 %s17, %s29
    %s31 = ssub.s32 %s18, %s25
    %s32 = sor.u32 %s30, %s31
    %p33 = scmp.eq.s32.totalorder %s32, 0
    %s35 = sadd.s32 %s34, 1
    %s36 = scalar_select %p33, %s34, %s35
    %p39 = pneg %p33
    %p40 = scmp.eq.s32.totalorder %s10, 3
    %p41 = por %p39, %p40
    %p42 = scmp.ne.s32.totalorder %s34, %s37
    %p43 = scmp.eq.s32.totalorder %s10, 0
    %p44 = por %p42, %p43
    %p45 = scmp.ne.s32.totalorder %s34, %s37
    %p46 = scmp.eq.s32.totalorder %s15, 3
    %p47 = por %p45, %p46
    %p48 = scmp.ne.s32.totalorder %s37, %s38
    %p49 = scmp.eq.s32.totalorder %s15, 0
    %p50 = por %p48, %p49
    %p51 = scmp.ne.s32.totalorder %s37, %s38
    %p52 = scmp.eq.s32.totalorder %s16, 3
    %p53 = por %p51, %p52
    %p55 = scmp.ne.s32.totalorder %s38, %s54
    %p56 = scmp.eq.s32.totalorder %s16, 0
    %p57 = por %p55, %p56
    %s59 = sadd.s32 %s58, 1
    %p62 = scmp.eq.s32.totalorder %s10, 3
    %p63 = scmp.ne.s32.totalorder %s58, %s60
    %p64 = scmp.eq.s32.totalorder %s10, 0
    %p65 = por %p63, %p64
    %p66 = scmp.ne.s32.totalorder %s58, %s60
    %p67 = scmp.eq.s32.totalorder %s15, 3
    %p68 = por %p66, %p67
    %p69 = scmp.ne.s32.totalorder %s60, %s61
    %p70 = scmp.eq.s32.totalorder %s15, 0
    %p71 = por %p69, %p70
    %p72 = scmp.ne.s32.totalorder %s60, %s61
    %p73 = scmp.eq.s32.totalorder %s16, 3
    %p74 = por %p72, %p73
    %p76 = scmp.ne.s32.totalorder %s61, %s75
    %p77 = scmp.eq.s32.totalorder %s16, 0
    %p78 = por %p76, %p77
    %s80 = sadd.s32 %s79, 1
    %p83 = scmp.eq.s32.totalorder %s10, 3
    %p84 = scmp.ne.s32.totalorder %s79, %s81
    %p85 = scmp.eq.s32.totalorder %s10, 0
    %p86 = por %p84, %p85
    %p87 = scmp.ne.s32.totalorder %s79, %s81
    %p88 = scmp.eq.s32.totalorder %s15, 3
    %p89 = por %p87, %p88
    %p90 = scmp.ne.s32.totalorder %s81, %s82
    %p91 = scmp.eq.s32.totalorder %s15, 0
    %p92 = por %p90, %p91
    %p93 = scmp.ne.s32.totalorder %s81, %s82
    %p94 = scmp.eq.s32.totalorder %s16, 3
    %p95 = por %p93, %p94
    %p97 = scmp.ne.s32.totalorder %s82, %s96
    %p98 = scmp.eq.s32.totalorder %s16, 0
    %p99 = por %p97, %p98
    %s101 = sadd.s32 %s100, 1
    %p104 = scmp.eq.s32.totalorder %s10, 3
    %p105 = scmp.ne.s32.totalorder %s100, %s102
    %p106 = scmp.eq.s32.totalorder %s10, 0
    %p107 = por %p105, %p106
    %p108 = scmp.ne.s32.totalorder %s100, %s102
    %p109 = scmp.eq.s32.totalorder %s15, 3
    %p110 = por %p108, %p109
    %p111 = scmp.ne.s32.totalorder %s102, %s103
    %p112 = scmp.eq.s32.totalorder %s15, 0
    %p113 = por %p111, %p112
    %p114 = scmp.ne.s32.totalorder %s102, %s103
    %p115 = scmp.eq.s32.totalorder %s16, 3
    %p116 = por %p114, %p115
    %p118 = scmp.ne.s32.totalorder %s103, %s117
    %p119 = scmp.eq.s32.totalorder %s16, 0
    %p120 = por %p118, %p119
    %s121 = ssub.s32 %s17, %s29
    %p122 = scmp.eq.s32.totalorder %s121, 0
    %s124 = sadd.s32 %s123, 1
    %s125 = scalar_select %p122, %s123, %s124
    %p128 = pneg %p122
    %p129 = scmp.eq.s32.totalorder %s10, 3
    %p130 = por %p128, %p129
    %p131 = scmp.ne.s32.totalorder %s123, %s126
    %p132 = scmp.eq.s32.totalorder %s10, 0
    %p133 = por %p131, %p132
    %p134 = scmp.ne.s32.totalorder %s123, %s126
    %p135 = scmp.eq.s32.totalorder %s15, 3
    %p136 = por %p134, %p135
    %p137 = scmp.ne.s32.totalorder %s126, %s127
    %p138 = scmp.eq.s32.totalorder %s15, 0
    %p139 = por %p137, %p138
    %p140 = scmp.ne.s32.totalorder %s126, %s127
    %p141 = scmp.eq.s32.totalorder %s16, 3
    %p142 = por %p140, %p141
    %p144 = scmp.ne.s32.totalorder %s127, %s143
    %p145 = scmp.eq.s32.totalorder %s16, 0
    %p146 = por %p144, %p145
    %p147 = scmp.le.s32.totalorder 1, %s10
    %p148 = scmp.lt.s32.totalorder %s10, 5
    %p149 = pnand %p147, %p148
    %p150 = pneg %p149
    // Predicated region
    $region9: #{a_call__.1} parent=5 // pred_check
      _
    $region10: #{a_call__.1} parent=5 // pred_check_branch
      %152 = sbr.rel (%p149) target = $region12
    $region11: #{a_call__.1} parent=5 // pred_region
      %s153 = ssub.s32 %s10, 1
      // Predicated region
      $region13: #{a_call__.1} parent=11 // pred_check
        %p154 = pneg %p71
      $region14: #{a_call__.1} parent=11 // pred_check_branch
        %156 = sbr.rel (%p154) target = $region16
      $region15: #{a_call__.1} parent=11 // pred_region
        _
      $region16: #{a_call__.1} parent=11 // pred_fallthru
        _
      // Predicated region
      $region17: #{a_call__.1} parent=11 // pred_check
        %p157 = pneg %p92
      $region18: #{a_call__.1} parent=11 // pred_check_branch
        %159 = sbr.rel (%p157) target = $region20
      $region19: #{a_call__.1} parent=11 // pred_region
        _
      $region20: #{a_call__.1} parent=11 // pred_fallthru
        _
      // Predicated region
      $region21: #{a_call__.1} parent=11 // pred_check
        %p160 = pneg %p113
      $region22: #{a_call__.1} parent=11 // pred_check_branch
        %162 = sbr.rel (%p160) target = $region24
      $region23: #{a_call__.1} parent=11 // pred_region
        _
      $region24: #{a_call__.1} parent=11 // pred_fallthru
        _
    $region12: #{a_call__.1} parent=5 // pred_fallthru
      _
    %p163 = scmp.lt.s32.totalorder %s10, 4
    // Predicated region
    $region25: #{a_call__.1} parent=5 // pred_check
      %p164 = pneg %p163
    $region26: #{a_call__.1} parent=5 // pred_check_branch
      %166 = sbr.rel (%p164) target = $region28
    $region27: #{a_call__.1} parent=5 // pred_region
      // Predicated region
      $region29: #{a_call__.1} parent=27 // pred_check
        %p167 = pneg %p44
      $region30: #{a_call__.1} parent=27 // pred_check_branch
        %169 = sbr.rel (%p167) target = $region32
      $region31: #{a_call__.1} parent=27 // pred_region
        %s170 = smul.u32 8, %s18
        %p171 = scmp.lt.s32.totalorder %s17, 3
        %s172 = scalar_select %p171, %s17, 3
        %p173 = scmp.lt.s32.totalorder %s170, 7
        %s174 = scalar_select %p173, %s170, 7
        %s175 = smul.addr %s172, 8
        %s176 = sadd.s32 %s174, %s175
        %s177 = smul.addr %s176, 4
        %s178 = scalar_lea.vmem %s0, %s177
        %s179 = smul.u32 8, %s18
      $region32: #{a_call__.1} parent=27 // pred_fallthru
        _
    $region28: #{a_call__.1} parent=5 // pred_fallthru
      _
    %p180 = scmp.le.s32.totalorder 1, %s10
    %p181 = scmp.lt.s32.totalorder %s10, 5
    %p182 = pnand %p180, %p181
    %p183 = pneg %p182
    // Predicated region
    $region33: #{a_call__.1} parent=5 // pred_check
      _
    $region34: #{a_call__.1} parent=5 // pred_check_branch
      %185 = sbr.rel (%p182) target = $region36
    $region35: #{a_call__.1} parent=5 // pred_region
      %s186 = ssub.s32 %s10, 1
      %s187 = smul.u32 8, %s20
      %p188 = scmp.lt.s32.totalorder %s19, 3
      %s189 = scalar_select %p188, %s19, 3
      %p190 = scmp.lt.s32.totalorder %s187, 7
      %s191 = scalar_select %p190, %s187, 7
      %s192 = smul.addr %s189, 8
      %s193 = sadd.s32 %s191, %s192
      %s194 = smul.addr %s193, 4
      %s195 = scalar_lea.vmem %s0, %s194
      %p196 = pneg %p50
      %p197 = pneg %p47
      %p198 = pneg %p71
      %p199 = pneg %p68
      %p200 = pneg %p92
      %p201 = pneg %p89
      %p202 = pneg %p113
      %p203 = pneg %p110
      %p204 = pneg %p139
      %p205 = pneg %p136
      %p206 = scmp.lt.s32.totalorder %s19, 3
      %s207 = scalar_select %p206, %s19, 3
      %s208 = scalar_lea.vmem %s4, %s207
      %s209 = smul.u32 8, %s20
      %p210 = scmp.lt.s32.totalorder %s19, 3
      %s211 = scalar_select %p210, %s19, 3
      %p212 = scmp.lt.s32.totalorder %s209, 7
      %s213 = scalar_select %p212, %s209, 7
      %s214 = smul.addr %s211, 8
      %s215 = sadd.s32 %s213, %s214
      %s216 = smul.addr %s215, 4
      %s217 = scalar_lea.vmem %s0, %s216
      %s218 = smul.u32 8, %s20
      %p219 = scmp.lt.s32.totalorder %s19, 3
      %s220 = scalar_select %p219, %s19, 3
      %s221 = scalar_lea.vmem %s4, %s220
      %p223 = scmp.eq.s32.totalorder %s20, 0
      // Predicated region
      $region37: #{a_call__.1} parent=35 // pred_check
        %p224 = pneg %p223
      $region38: #{a_call__.1} parent=35 // pred_check_branch
        %226 = sbr.rel (%p224) target = $region40
      $region39: #{a_call__.1} parent=35 // pred_region
        %vm227 = vcmask 516096
        %228 = vst.msk [vmem:[#allocation2] sm:$0x1] %vm227, 0.0
      $region40: #{a_call__.1} parent=35 // pred_fallthru
        _
      %v229 = vld [vmem:[%s217] sm:$0xf]
      %v230 = vld [vmem:[%s217 + $0x4] sm:$0xf]
      %v231 = vld [vmem:[%s217 + $0x8] sm:$0xf]
      %v232 = vld [vmem:[%s217 + $0xc] sm:$0xf]
      %v233 = vld [vmem:[%s217 + $0x10] sm:$0xf]
      %v234 = vld [vmem:[%s217 + $0x14] sm:$0xf]
      %v235 = vld [vmem:[%s217 + $0x18] sm:$0xf]
      %v236 = vld [vmem:[%s217 + $0x1c] sm:$0xf]
      %v237 = vld [vmem:[%s1] sm:$0xf]
      %v238 = vld [vmem:[%s1 + $0x4] sm:$0xf]
      %v239 = vld [vmem:[%s1 + $0x8] sm:$0xf]
      %v240 = vld [vmem:[%s1 + $0xc] sm:$0xf]
      %v241 = vld [vmem:[%s1 + $0x10] sm:$0xf]
      %v242 = vld [vmem:[%s1 + $0x14] sm:$0xf]
      %v243 = vld [vmem:[%s1 + $0x18] sm:$0xf]
      %v244 = vld [vmem:[%s1 + $0x1c] sm:$0xf]
      %v245 = vld [vmem:[%s1 + $0x20] sm:$0xf]
      %v246 = vld [vmem:[%s1 + $0x24] sm:$0xf]
      %v247 = vld [vmem:[%s1 + $0x28] sm:$0xf]
      %v248 = vld [vmem:[%s1 + $0x2c] sm:$0xf]
      %v249 = vld [vmem:[%s1 + $0x30] sm:$0x1]
      %v258 = vunpack.c.l.b16 %v229
      %v259 = vunpack.c.l.b16 %v230
      %v260 = vunpack.c.l.b16 %v231
      %v261 = vunpack.c.l.b16 %v232
      %v262 = vunpack.c.l.b16 %v233
      %v263 = vunpack.c.l.b16 %v234
      %v264 = vunpack.c.l.b16 %v235
      %v265 = vunpack.c.l.b16 %v236
      %v266 = vpack.c.b16 %v259, %v258
      %v267 = vpack.c.b16 %v261, %v260
      %v268 = vpack.c.b16 %v263, %v262
      %v269 = vpack.c.b16 %v265, %v264
      %v283 = vunpack.c.l.b16 %v237
      %v284 = vunpack.c.l.b16 %v238
      %v285 = vunpack.c.l.b16 %v239
      %v286 = vunpack.c.l.b16 %v240
      %v287 = vunpack.c.l.b16 %v241
      %v288 = vunpack.c.l.b16 %v242
      %v289 = vunpack.c.l.b16 %v243
      %v290 = vunpack.c.l.b16 %v244
      %v291 = vunpack.c.l.b16 %v245
      %v292 = vunpack.c.l.b16 %v246
      %v293 = vunpack.c.l.b16 %v247
      %v294 = vunpack.c.l.b16 %v248
      %v295 = vunpack.c.l.b16 %v249
      %v296 = vpack.c.b16 %v284, %v283
      %v297 = vpack.c.b16 %v286, %v285
      %v298 = vpack.c.b16 %v288, %v287
      %v299 = vpack.c.b16 %v290, %v289
      %v300 = vpack.c.b16 %v292, %v291
      %v301 = vpack.c.b16 %v294, %v293
      %v302 = vpack.c.b16 %v295, %v295
      %vm309 = vcmask 801792
      %v311 = vsel %vm309, %v266, 0
      %v314 = vsel %vm309, %v267, 0
      %v317 = vsel %vm309, %v268, 0
      %v320 = vsel %vm309, %v269, 0
      %vm322 = vcmask 1040384
      %v324 = vsel %vm322, %v302, 0
      %326 = vmatprep.subr.bf16.mxu0 0
      %327 = vmatpush1.bf16.msra.mxu0 %v296
      %328 = vmatprep.subr.bf16.mxu0 0
      %329 = vmatpush1.bf16.msra.mxu0 %v297
      %330 = vmatprep.subr.bf16.mxu0 0
      %331 = vmatpush1.bf16.msra.mxu0 %v298
      %332 = vmatprep.subr.bf16.mxu0 0
      %333 = vmatpush1.bf16.msra.mxu0 %v299
      %334 = vmatprep.subr.bf16.mxu0 0
      %335 = vmatpush1.bf16.msra.mxu0 %v300
      %336 = vmatprep.subr.bf16.mxu0 0
      %337 = vmatpush1.bf16.msra.mxu0 %v301
      %338 = vmatprep.subr.bf16.mxu0 0
      %339 = vmatpush1.bf16.msra.mxu0 %v324
      %340 = vmatprep.subr.bf16.mxu0 0
      %341 = vmatpush1.bf16.msra.mxu0 0
      %342 = vmatprep.subr.bf16.mxu0 0
      %343 = vmatpush1.bf16.msra.mxu0 0
      %344 = vmatprep.subr.bf16.mxu0 0
      %345 = vmatpush1.bf16.msra.mxu0 0
      %346 = vmatprep.subr.bf16.mxu0 0
      %347 = vmatpush1.bf16.msra.mxu0 0
      %348 = vmatprep.subr.bf16.mxu0 0
      %349 = vmatpush1.bf16.msra.mxu0 0
      %350 = vmatprep.subr.bf16.mxu0 0
      %351 = vmatpush1.bf16.msra.mxu0 0
      %352 = vmatprep.subr.bf16.mxu0 0
      %353 = vmatpush1.bf16.msra.mxu0 0
      %354 = vmatprep.subr.bf16.mxu0 0
      %355 = vmatpush1.bf16.msra.mxu0 0
      %356 = vmatprep.subr.bf16.mxu0 0
      %357 = vmatpush1.bf16.msra.mxu0 0
      %358 = vmatprep.mubr.bf16.mxu0 0
      %359 = vmatmul.mubr.bf16.gmra.mrb[0].mxu0 %v311
      %v360 = vpop.f32.mrb[0].mxu0
      %v361 = vadd.f32 0.0, %v360
      %v362 = vpop.f32.mrb[0].mxu0
      %v363 = vpop.f32.mrb[0].mxu0
      %v364 = vadd.f32 0.0, %v363
      %v365 = vpop.f32.mrb[0].mxu0
      %366 = vmatprep.mubr.bf16.mxu0 0
      %367 = vmatmul.mubr.bf16.gmra.mrb[0].mxu0 %v314
      %v368 = vpop.f32.mrb[0].mxu0
      %v369 = vadd.f32 0.0, %v368
      %v370 = vpop.f32.mrb[0].mxu0
      %v371 = vpop.f32.mrb[0].mxu0
      %v372 = vadd.f32 0.0, %v371
      %v373 = vpop.f32.mrb[0].mxu0
      %374 = vmatprep.mubr.bf16.mxu0 0
      %375 = vmatmul.mubr.bf16.gmra.mrb[0].mxu0 %v317
      %v376 = vpop.f32.mrb[0].mxu0
      %v377 = vadd.f32 0.0, %v376
      %v378 = vpop.f32.mrb[0].mxu0
      %v379 = vpop.f32.mrb[0].mxu0
      %v380 = vadd.f32 0.0, %v379
      %v381 = vpop.f32.mrb[0].mxu0
      %382 = vmatprep.mubr.bf16.mxu0 0
      %383 = vmatmul.mubr.bf16.gmra.mrb[0].mxu0 %v320
      %v384 = vpop.f32.mrb[0].mxu0
      %v385 = vadd.f32 0.0, %v384
      %v386 = vpop.f32.mrb[0].mxu0
      %v387 = vpop.f32.mrb[0].mxu0
      %v388 = vadd.f32 0.0, %v387
      %v389 = vpop.f32.mrb[0].mxu0
      %390 = vdwg.mxu0
      %v391 = vld [vmem:[%s2] sm:$0x1]
      %v393 = vlaneseq
      %v394 = vshrl.u32 %v393, 7
      %v395 = vsub.s32 0, %v394
      %v396 = vrot.slane %v391, %v395
      %v398 = vmul.f32 %v361, %v396
      %v399 = vmul.f32 %v364, %v396
      %v400 = vmul.f32 %v369, %v396
      %v401 = vmul.f32 %v372, %v396
      %v402 = vmul.f32 %v377, %v396
      %v403 = vmul.f32 %v380, %v396
      %v404 = vmul.f32 %v385, %v396
      %v405 = vmul.f32 %v388, %v396
      %v406 = vld [vmem:[%s3] sm:$0x1]
      %v408 = vlaneseq
      %v409 = vshrl.u32 %v408, 7
      %v410 = vsub.s32 0, %v409
      %v411 = vrot.slane %v406, %v410
      %v413 = vadd.f32 %v398, %v411
      %v414 = vadd.f32 %v399, %v411
      %v415 = vadd.f32 %v400, %v411
      %v416 = vadd.f32 %v401, %v411
      %v417 = vadd.f32 %v402, %v411
      %v418 = vadd.f32 %v403, %v411
      %v419 = vadd.f32 %v404, %v411
      %v420 = vadd.f32 %v405, %v411
      %v421 = vmax.f32 %v413, 0.0
      %v422 = vmax.f32 %v414, 0.0
      %v423 = vmax.f32 %v415, 0.0
      %v424 = vmax.f32 %v416, 0.0
      %v425 = vmax.f32 %v417, 0.0
      %v426 = vmax.f32 %v418, 0.0
      %v427 = vmax.f32 %v419, 0.0
      %v428 = vmax.f32 %v420, 0.0
      %v429 = vld [vmem:[#allocation2] sm:$0x1]
      %vm430 = vcmask 523264
      %v431 = vsel %vm430, %v421, 0.0
      %v432 = vsel %vm430, %v422, 0.0
      %v433 = vadd.f32 %v431, %v432
      %v434 = vsel %vm430, %v423, 0.0
      %v435 = vadd.f32 %v433, %v434
      %v436 = vsel %vm430, %v424, 0.0
      %v437 = vadd.f32 %v435, %v436
      %v438 = vsel %vm430, %v425, 0.0
      %v439 = vadd.f32 %v437, %v438
      %v440 = vsel %vm430, %v426, 0.0
      %v441 = vadd.f32 %v439, %v440
      %v442 = vsel %vm430, %v427, 0.0
      %v443 = vadd.f32 %v441, %v442
      %v444 = vsel %vm430, %v428, 0.0
      %v445 = vadd.f32 %v443, %v444
      %v446 = vrot.slane %v445, 4
      %v447 = vadd.f32 %v445, %v446
      %v448 = vrot.slane %v447, 2
      %v449 = vadd.f32 %v447, %v448
      %v450 = vrot.slane %v449, 1
      %v451 = vadd.f32 %v449, %v450
      %v452 = vadd.f32 %v429, %v451
      %vm453 = vcmask 516096
      %454 = vst.msk [vmem:[#allocation2] sm:$0x1] %vm453, %v452
      // Predicated region
      $region41: #{a_call__.1} parent=35 // pred_check
        %p455 = pneg %p223
      $region42: #{a_call__.1} parent=35 // pred_check_branch
        %457 = sbr.rel (%p455) target = $region44
      $region43: #{a_call__.1} parent=35 // pred_region
        %v458 = vld [vmem:[#allocation2] sm:$0x1]
        %459 = vst.msk [vmem:[%s221] sm:$0x1] %vm453, %v458
      $region44: #{a_call__.1} parent=35 // pred_fallthru
        _
      %p460 = scmp.lt.s32.totalorder %s19, 3
      %s461 = scalar_select %p460, %s19, 3
      %s462 = scalar_lea.vmem %s4, %s461
      // Predicated region
      $region45: #{a_call__.1} parent=35 // pred_check
        %p463 = pneg %p136
      $region46: #{a_call__.1} parent=35 // pred_check_branch
        %465 = sbr.rel (%p463) target = $region48
      $region47: #{a_call__.1} parent=35 // pred_region
        _
      $region48: #{a_call__.1} parent=35 // pred_fallthru
        _
    $region36: #{a_call__.1} parent=5 // pred_fallthru
      _
    %p466 = scmp.le.s32.totalorder 2, %s10
    // Predicated region
    $region49: #{a_call__.1} parent=5 // pred_check
      %p467 = pneg %p466
    $region50: #{a_call__.1} parent=5 // pred_check_branch
      %469 = sbr.rel (%p467) target = $region52
    $region51: #{a_call__.1} parent=5 // pred_region
      %s470 = ssub.s32 %s10, 2
      // Predicated region
      $region53: #{a_call__.1} parent=51 // pred_check
        %p471 = pneg %p142
      $region54: #{a_call__.1} parent=51 // pred_check_branch
        %473 = sbr.rel (%p471) target = $region56
      $region55: #{a_call__.1} parent=51 // pred_region
        %p474 = scmp.lt.s32.totalorder %s21, 3
        %s475 = scalar_select %p474, %s21, 3
        %s476 = scalar_lea.vmem %s4, %s475
      $region56: #{a_call__.1} parent=51 // pred_fallthru
        _
    $region52: #{a_call__.1} parent=5 // pred_fallthru
      _
  $region6: #{a_call__.1} parent=0 // loop_footer
    %s14 = sadd.s32 1, %s10
  $region7: #{a_call__.1} parent=0 // loop_footer_branch
    %9 = sbr.rel target = $region3
  $region8: #{a_call__.1} parent=0 // loop_exit
    _

</llo_original>
